<compile_context>
chip_gen: v7x
topology: tpu7x:2x2x1
jax: 0.10.0
libtpu: 0.0.40
codegen_flags: <defaults>
</compile_context>

<pallas_src>
import numpy as np
import jax
import jax.numpy as jnp
from jax.experimental import pallas as pl
from jax.experimental.pallas import tpu as pltpu

# ----------------------------- model dimensions -----------------------------
NODE_FEATS = 16
EDGE_FEATS = 10
IN_FEATS = 2 * NODE_FEATS + EDGE_FEATS      # 42
IN_PAD = 48                                  # 42 real + 6 zero-pad rows
HIDDEN = 64
OUT_FEATS = 2
OUT_PAD = 8                                  # 2 real + 6 zero-pad rows (f32 sublane=8)
LEAK = 0.1

LANE = 128                                   # lane width: edge tiles are multiples of this
MAX_TM = 2048                                # big tile: amortizes ~0.35us/step overhead


def _num_tensorcores():
    """Best-effort TensorCore-per-chip detection (v7x has 2); default 1."""
    try:
        info = pltpu.get_tpu_info()
        for attr in ("num_cores", "tensor_cores_per_chip", "cores_per_chip",
                     "num_tensorcores"):
            v = getattr(info, attr, None)
            if isinstance(v, int) and v > 0:
                return v
    except Exception:
        pass
    try:
        kind = jax.local_devices()[0].device_kind.lower()
        return 2 if "v7" in kind else 1
    except Exception:
        return 1


def _bucket_pow2(n, base):
    """Smallest base * 2^k >= n (shape bucketing bounds recompiles)."""
    b = base
    while b < n:
        b *= 2
    return b


def _choose_tiling(num_edges, multi_core):
    """Return (tm, e_pad): tm % 128 == 0, e_pad % tm == 0, e_pad = 128 * 2^k.

    Single-TC chips get one big tile whenever the problem fits (grid is a
    serial loop there, so splitting is pure overhead).  Multi-TC chips (v7x)
    split into two tiles only when each half is still >= 512 edges.
    """
    e_pad = _bucket_pow2(max(num_edges, 1), LANE)
    if e_pad <= MAX_TM:
        if multi_core and e_pad >= 2 * 512:
            return e_pad // 2, e_pad          # 2 "parallel" steps, one per TC
        return e_pad, e_pad                   # single step
    # Large problems: fixed MAX_TM tiles; e_pad (pow2 mult of 128 >= 2048) is a
    # multiple of MAX_TM, so the step count is a bounded set of powers of two.
    return MAX_TM, e_pad


# ------------------------------- Pallas kernel ------------------------------
def edge_mlp_kernel(feat_ref, w1_ref, b1_ref, w2_ref, b2_ref, w3_ref, b3_ref,
                    out_ref):
    # Transposed, lane-dense layout: feat (IN_PAD, tm), weights pre-transposed
    # (out_dim, in_dim).  bf16 operands feed the MXU; accumulation, bias-add
    # and LeakyReLU stay in f32 (v5e VPU has no bf16).
    x = feat_ref[...]                                            # (48, tm) bf16
    h = jnp.dot(w1_ref[...], x,
                preferred_element_type=jnp.float32) + b1_ref[...]   # (64, tm)
    h = jnp.where(h > 0, h, LEAK * h)                            # LeakyReLU
    h = jnp.dot(w2_ref[...], h.astype(jnp.bfloat16),
                preferred_element_type=jnp.float32) + b2_ref[...]   # (64, tm)
    h = jnp.where(h > 0, h, LEAK * h)                            # LeakyReLU
    out_ref[...] = jnp.dot(w3_ref[...], h.astype(jnp.bfloat16),
                           preferred_element_type=jnp.float32) + b3_ref[...]


def edge_predictor_pallas(feat_slab, w1t, b1, w2t, b2, w3t, b3, tm):
    """feat_slab: (IN_PAD, E_pad) bf16, E_pad % tm == 0, tm % 128 == 0."""
    e_pad = feat_slab.shape[1]
    grid = (e_pad // tm,)
    return pl.pallas_call(
        edge_mlp_kernel,
        out_shape=jax.ShapeDtypeStruct((OUT_PAD, e_pad), jnp.float32),
        grid_spec=pltpu.PrefetchScalarGridSpec(
            num_scalar_prefetch=0,
            grid=grid,
            in_specs=[
                pl.BlockSpec((IN_PAD, tm), lambda i: (0, i)),
                # Weight/bias blocks cover the full arrays with a constant
                # index_map -> stay resident across grid steps.
                pl.BlockSpec((HIDDEN, IN_PAD), lambda i: (0, 0)),
                pl.BlockSpec((HIDDEN, 1), lambda i: (0, 0)),
                pl.BlockSpec((HIDDEN, HIDDEN), lambda i: (0, 0)),
                pl.BlockSpec((HIDDEN, 1), lambda i: (0, 0)),
                pl.BlockSpec((OUT_PAD, HIDDEN), lambda i: (0, 0)),
                pl.BlockSpec((OUT_PAD, 1), lambda i: (0, 0)),
            ],
            out_specs=pl.BlockSpec((OUT_PAD, tm), lambda i: (0, i)),
        ),
        compiler_params=pltpu.CompilerParams(
            dimension_semantics=("parallel",)),
    )(feat_slab, w1t, b1, w2t, b2, w3t, b3)


# ----------------------- host-side graph-building glue ----------------------
# TODO(synk): cluster formation / compton filtering / complete-graph building
# are inherently data-dependent scatter/gather ops with no clean Pallas
# equivalent; they are done on host (numpy), matching the PyTorch wrapper.
def form_clusters_new(data):
    """data: (N, 5) [x, y, z, batch_id, cluster_id] -> list of index arrays."""
    clusts = []
    keys = np.stack([data[:, 3], data[:, 4]], axis=1)
    uniq = np.unique(keys, axis=0)
    for b, c in uniq:
        if c < 0:
            continue
        idx = np.where((data[:, 3] == b) & (data[:, 4] == c))[0]
        clusts.append(idx)
    return clusts


def filter_compton(clusts, thresh):
    return [i for i, c in enumerate(clusts) if len(c) > thresh]


def get_cluster_batch(data, clusts):
    return np.array([int(data[c[0], 3]) for c in clusts], dtype=np.int64)


def complete_graph(batch):
    """All undirected (i<j) pairs of clusters within the same batch entry."""
    edges = []
    for b in np.unique(batch):
        ids = np.where(batch == b)[0]
        for a in range(len(ids)):
            for c in range(a + 1, len(ids)):
                edges.append((ids[a], ids[c]))
    if not edges:
        return np.zeros((2, 0), dtype=np.int64)
    return np.array(edges, dtype=np.int64).T                 # (2, E)


def cluster_vtx_features(data, clusts):
    """16-dim geometric node features per cluster."""
    feats = []
    for c in clusts:
        pts = data[c, :3]
        center = pts.mean(axis=0)
        x = pts - center
        cov = (x.T @ x) / max(len(c), 1)
        w, v = np.linalg.eigh(cov)                            # ascending
        axis = v[:, -1]
        axis = axis * np.sign(axis[np.argmax(np.abs(axis))])  # deterministic sign
        f = np.concatenate([
            center,                                            # 3
            cov[np.triu_indices(3)],                           # 6
            w,                                                 # 3
            axis,                                              # 3
            np.array([float(len(c))]),                         # 1
        ])
        feats.append(f)
    return np.stack(feats).astype(np.float32)                 # (C, 16)


def cluster_edge_features(data, clusts, edge_index):
    """10-dim geometric edge features per edge."""
    centers = np.stack([data[c, :3].mean(axis=0) for c in clusts])
    feats = []
    for k in range(edge_index.shape[1]):
        i, j = edge_index[0, k], edge_index[1, k]
        disp = centers[j] - centers[i]
        f = np.concatenate([
            disp,                                              # 3
            np.array([np.linalg.norm(disp)]),                  # 1
            centers[i],                                        # 3
            centers[j],                                        # 3
        ])
        feats.append(f)
    return np.stack(feats).astype(np.float32)                 # (E, 10)


# --------------------------- EdgeModel (Pallas) ------------------------------
class EdgeModelPallas:
    def __init__(self, cfg):
        if 'modules' in cfg:
            self.model_config = cfg['modules']['clust_edge_model']
        else:
            self.model_config = cfg
        self.remove_compton = self.model_config.get('remove_compton', True)
        self.compton_thresh = self.model_config.get('compton_thresh', 30)
        self.multi_core = _num_tensorcores() >= 2

        # Deterministic parameter init for the synthetic "edge_only" predictor.
        # Weights are stored pre-transposed (out_dim, in_dim) for the
        # edges-on-lanes kernel layout; padding rows/cols are zero so the
        # padded lanes/sublanes stay mathematically inert.
        key = jax.random.PRNGKey(0)
        k1, k2, k3, k4, k5, k6 = jax.random.split(key, 6)
        w1 = jax.random.normal(k1, (IN_FEATS, HIDDEN)) * (2.0 / IN_FEATS) ** 0.5
        w2 = jax.random.normal(k3, (HIDDEN, HIDDEN)) * (2.0 / HIDDEN) ** 0.5
        w3 = jax.random.normal(k5, (HIDDEN, OUT_FEATS)) * (2.0 / HIDDEN) ** 0.5

        w1t = jnp.zeros((HIDDEN, IN_PAD), jnp.float32).at[:, :IN_FEATS].set(w1.T)
        b1 = (jax.random.normal(k2, (HIDDEN, 1)) * 0.01).astype(jnp.float32)
        w2t = w2.T.astype(jnp.float32)
        b2 = (jax.random.normal(k4, (HIDDEN, 1)) * 0.01).astype(jnp.float32)
        w3t = jnp.zeros((OUT_PAD, HIDDEN), jnp.float32).at[:OUT_FEATS, :].set(w3.T)
        b3 = jnp.zeros((OUT_PAD, 1), jnp.float32).at[:OUT_FEATS, :].set(
            jax.random.normal(k6, (OUT_FEATS, 1)) * 0.01)

        # f32 copies kept for the precision-validation reference.
        self.params_f32 = (w1t, b1, w2t, b2, w3t, b3)
        # bf16 weights (MXU-native, half the HBM read bytes); biases stay f32
        # since they are added to the f32 accumulator.
        self.params = (w1t.astype(jnp.bfloat16), b1,
                       w2t.astype(jnp.bfloat16), b2,
                       w3t.astype(jnp.bfloat16), b3)

    def forward(self, data):
        d = np.asarray(data[0])
        clusts = form_clusters_new(d)
        if self.remove_compton:
            selection = filter_compton(clusts, self.compton_thresh)
            if not len(selection):
                return {'edge_pred': [jnp.zeros((0, OUT_FEATS), jnp.float32)]}
            clusts = [clusts[i] for i in selection]
        batch = get_cluster_batch(d, clusts)
        edge_index = complete_graph(batch)
        if not edge_index.shape[0] or edge_index.shape[1] == 0:
            return {'edge_pred': [jnp.zeros((0, OUT_FEATS), jnp.float32)]}

        x = cluster_vtx_features(d, clusts)                   # (C, 16)
        e = cluster_edge_features(d, clusts, edge_index)      # (E, 10)

        # Per-edge concatenated input [x_src | x_dst | e], packed directly into
        # a transposed, lane-dense (48, E_pad) bf16 slab (42 real rows).
        # TODO(synk): a further input-traffic cut is possible by fusing the
        # gather/concat into the kernel via PrefetchScalarGridSpec(edge_index)
        # with the tiny (C,16) node table resident in VMEM.
        src, dst = edge_index[0], edge_index[1]
        feat = np.concatenate([x[src], x[dst], e], axis=1)    # (E, 42) f32
        E = feat.shape[0]
        tm, e_pad = _choose_tiling(E, self.multi_core)
        feat_slab = np.zeros((IN_PAD, e_pad), dtype=jnp.bfloat16)
        feat_slab[:IN_FEATS, :E] = feat.T                     # host-side bf16 cast
        feat_slab = jnp.asarray(feat_slab)

        out_pad = edge_predictor_pallas(feat_slab, *self.params, tm)
        edge_pred = out_pad[:OUT_FEATS, :E].T                 # (E, 2)
        return {'edge_pred': [edge_pred], 'edge_index': edge_index,
                'feat_slab': feat_slab, 'feat_f32': feat}


# ---------------------------------- main -------------------------------------
def _reference_mlp_bf16(feat_slab_bf16, w1t, b1, w2t, b2, w3t, b3):
    """Plain-JAX reference with the identical precision recipe (transposed)."""
    h = jnp.dot(w1t, feat_slab_bf16, preferred_element_type=jnp.float32) + b1
    h = jnp.where(h > 0, h, LEAK * h)
    h = jnp.dot(w2t, h.astype(jnp.bfloat16),
                preferred_element_type=jnp.float32) + b2
    h = jnp.where(h > 0, h, LEAK * h)
    return jnp.dot(w3t, h.astype(jnp.bfloat16),
                   preferred_element_type=jnp.float32) + b3


def _reference_mlp_f32(feat_t_f32, w1t, b1, w2t, b2, w3t, b3):
    """Pure-f32 reference (the 'true' model) for bf16-precision validation."""
    h = jnp.dot(w1t[:, :IN_FEATS], feat_t_f32) + b1
    h = jnp.where(h > 0, h, LEAK * h)
    h = jnp.dot(w2t, h) + b2
    h = jnp.where(h > 0, h, LEAK * h)
    return jnp.dot(w3t, h) + b3


if __name__ == "__main__":
    # Synthetic dbscan-style data: (N, 5) = [x, y, z, batch_id, cluster_id]
    # 2 batch entries, 3 clusters each, 12 points per cluster -> N = 72.
    key = jax.random.PRNGKey(0)
    rows = []
    pts_per_cluster = 12
    centers = np.array([[0., 0., 0.], [5., 1., -2.], [-3., 4., 2.],
                        [1., -5., 3.], [6., 6., 6.], [-4., -4., 1.]])
    ci = 0
    for b in range(2):
        for c in range(3):
            key, sub = jax.random.split(key)
            noise = np.asarray(jax.random.normal(sub, (pts_per_cluster, 3)))
            xyz = centers[ci] + 0.5 * noise
            bc = np.full((pts_per_cluster, 1), float(b))
            cc = np.full((pts_per_cluster, 1), float(c))
            rows.append(np.concatenate([xyz, bc, cc], axis=1))
            ci += 1
    data0 = np.concatenate(rows, axis=0).astype(np.float32)   # (72, 5)

    cfg = {'remove_compton': True, 'compton_thresh': 5,
           'name': 'edge_only', 'model_cfg': {}}
    model = EdgeModelPallas(cfg)
    out = model.forward([data0])
    edge_pred = jax.block_until_ready(out['edge_pred'][0])
    E = edge_pred.shape[0]

    # 1) Same-precision-recipe reference (tight): verifies the kernel itself.
    ref_bf16 = _reference_mlp_bf16(out['feat_slab'], *model.params)
    np.testing.assert_allclose(np.asarray(edge_pred),
                               np.asarray(ref_bf16[:OUT_FEATS, :E].T),
                               rtol=2e-3, atol=2e-3)

    # 2) Pure-f32 reference (loose): quantifies bf16-input precision loss.
    feat_t = jnp.asarray(out['feat_f32'].T)                   # (42, E) f32
    ref_f32 = _reference_mlp_f32(feat_t, *model.params_f32)
    np.testing.assert_allclose(np.asarray(edge_pred),
                               np.asarray(ref_f32[:OUT_FEATS, :E].T),
                               rtol=1e-1, atol=2e-1)

    assert edge_pred.shape == (out['edge_index'].shape[1], OUT_FEATS)
    assert np.all(np.isfinite(np.asarray(edge_pred)))
    print("KERNEL_OK")
</pallas_src>

<mosaic_0001>
module attributes {stable_mosaic.version = 11 : i64} {
  func.func @edge_mlp_kernel(%arg0: i32, %arg1: memref<48x128xbf16, #tpu.memory_space<vmem>>, %arg2: memref<64x48xbf16, #tpu.memory_space<vmem>>, %arg3: memref<64x1xf32, #tpu.memory_space<vmem>>, %arg4: memref<64x64xbf16, #tpu.memory_space<vmem>>, %arg5: memref<64x1xf32, #tpu.memory_space<vmem>>, %arg6: memref<8x64xbf16, #tpu.memory_space<vmem>>, %arg7: memref<8x1xf32, #tpu.memory_space<vmem>>, %arg8: memref<8x128xf32, #tpu.memory_space<vmem>>) attributes {dimension_semantics = [#tpu.dimension_semantics<parallel>], iteration_bounds = array<i64: 1>, scalar_prefetch = 0 : i64, scratch_operands = 0 : i64, tpu.core_type = #tpu.core_type<tc>, window_params = [{transform_indices = @transform_0, window_bounds = array<i64: 48, 128>}, {pipeline_mode = #tpu.pipeline_mode<synchronous>, transform_indices = @transform_1, window_bounds = array<i64: 64, 48>}, {pipeline_mode = #tpu.pipeline_mode<synchronous>, transform_indices = @transform_2, window_bounds = array<i64: 64, 1>}, {pipeline_mode = #tpu.pipeline_mode<synchronous>, transform_indices = @transform_3, window_bounds = array<i64: 64, 64>}, {pipeline_mode = #tpu.pipeline_mode<synchronous>, transform_indices = @transform_4, window_bounds = array<i64: 64, 1>}, {pipeline_mode = #tpu.pipeline_mode<synchronous>, transform_indices = @transform_5, window_bounds = array<i64: 8, 64>}, {pipeline_mode = #tpu.pipeline_mode<synchronous>, transform_indices = @transform_6, window_bounds = array<i64: 8, 1>}, {transform_indices = @transform_7, window_bounds = array<i64: 8, 128>}]} {
    %c0 = arith.constant 0 : index
    %c0_0 = arith.constant 0 : index
    %0 = vector.load %arg1[%c0, %c0_0] : memref<48x128xbf16, #tpu.memory_space<vmem>>, vector<48x128xbf16>
    %c0_1 = arith.constant 0 : index
    %c0_2 = arith.constant 0 : index
    %1 = vector.load %arg2[%c0_1, %c0_2] : memref<64x48xbf16, #tpu.memory_space<vmem>>, vector<64x48xbf16>
    %cst = arith.constant dense<0.000000e+00> : vector<64x128xf32>
    %2 = tpu.matmul %1, %0, %cst {dimension_numbers = #tpu.dot_dimension_numbers<[1], [0], [0], [1], [0, 0, 1, 1], [], []>} : vector<64x48xbf16>, vector<48x128xbf16>, vector<64x128xf32> -> vector<64x128xf32>
    %c0_3 = arith.constant 0 : index
    %c0_4 = arith.constant 0 : index
    %3 = vector.load %arg3[%c0_3, %c0_4] : memref<64x1xf32, #tpu.memory_space<vmem>>, vector<64x1xf32>
    %4 = vector.broadcast %3 : vector<64x1xf32> to vector<64x128xf32>
    %5 = arith.addf %2, %4 : vector<64x128xf32>
    %cst_5 = arith.constant 0.000000e+00 : f32
    %6 = vector.broadcast %cst_5 : f32 to vector<64x128xf32>
    %7 = arith.cmpf ogt, %5, %6 : vector<64x128xf32>
    %cst_6 = arith.constant 1.000000e-01 : f32
    %8 = vector.broadcast %cst_6 : f32 to vector<64x128xf32>
    %9 = arith.mulf %8, %5 : vector<64x128xf32>
    %10 = arith.select %7, %5, %9 : vector<64x128xi1>, vector<64x128xf32>
    %c0_7 = arith.constant 0 : index
    %c0_8 = arith.constant 0 : index
    %11 = vector.load %arg4[%c0_7, %c0_8] : memref<64x64xbf16, #tpu.memory_space<vmem>>, vector<64x64xbf16>
    %12 = arith.truncf %10 : vector<64x128xf32> to vector<64x128xbf16>
    %cst_9 = arith.constant dense<0.000000e+00> : vector<64x128xf32>
    %13 = tpu.matmul %11, %12, %cst_9 {dimension_numbers = #tpu.dot_dimension_numbers<[1], [0], [0], [1], [0, 0, 1, 1], [], []>} : vector<64x64xbf16>, vector<64x128xbf16>, vector<64x128xf32> -> vector<64x128xf32>
    %c0_10 = arith.constant 0 : index
    %c0_11 = arith.constant 0 : index
    %14 = vector.load %arg5[%c0_10, %c0_11] : memref<64x1xf32, #tpu.memory_space<vmem>>, vector<64x1xf32>
    %15 = vector.broadcast %14 : vector<64x1xf32> to vector<64x128xf32>
    %16 = arith.addf %13, %15 : vector<64x128xf32>
    %cst_12 = arith.constant 0.000000e+00 : f32
    %17 = vector.broadcast %cst_12 : f32 to vector<64x128xf32>
    %18 = arith.cmpf ogt, %16, %17 : vector<64x128xf32>
    %cst_13 = arith.constant 1.000000e-01 : f32
    %19 = vector.broadcast %cst_13 : f32 to vector<64x128xf32>
    %20 = arith.mulf %19, %16 : vector<64x128xf32>
    %21 = arith.select %18, %16, %20 : vector<64x128xi1>, vector<64x128xf32>
    %c0_14 = arith.constant 0 : index
    %c0_15 = arith.constant 0 : index
    %22 = vector.load %arg6[%c0_14, %c0_15] : memref<8x64xbf16, #tpu.memory_space<vmem>>, vector<8x64xbf16>
    %23 = arith.truncf %21 : vector<64x128xf32> to vector<64x128xbf16>
    %cst_16 = arith.constant dense<0.000000e+00> : vector<8x128xf32>
    %24 = tpu.matmul %22, %23, %cst_16 {dimension_numbers = #tpu.dot_dimension_numbers<[1], [0], [0], [1], [0, 0, 1, 1], [], []>} : vector<8x64xbf16>, vector<64x128xbf16>, vector<8x128xf32> -> vector<8x128xf32>
    %c0_17 = arith.constant 0 : index
    %c0_18 = arith.constant 0 : index
    %25 = vector.load %arg7[%c0_17, %c0_18] : memref<8x1xf32, #tpu.memory_space<vmem>>, vector<8x1xf32>
    %26 = vector.broadcast %25 : vector<8x1xf32> to vector<8x128xf32>
    %27 = arith.addf %24, %26 : vector<8x128xf32>
    %c0_19 = arith.constant 0 : index
    %c0_20 = arith.constant 0 : index
    %28 = vector.load %arg8[%c0_19, %c0_20] : memref<8x128xf32, #tpu.memory_space<vmem>>, vector<8x128xf32>
    tpu.vector_store %arg8[%c0_19, %c0_20], %27 {strides = array<i32>} : memref<8x128xf32, #tpu.memory_space<vmem>>, vector<8x128xf32>,
    return
  }
  func.func @transform_0(%arg0: i32) -> (i32, i32) {
    %c0_i32 = arith.constant 0 : i32
    %c0_i32_0 = arith.constant 0 : i32
    return %c0_i32, %arg0 : i32, i32
  }
  func.func @transform_1(%arg0: i32) -> (i32, i32) {
    %c0_i32 = arith.constant 0 : i32
    %c0_i32_0 = arith.constant 0 : i32
    %c0_i32_1 = arith.constant 0 : i32
    return %c0_i32, %c0_i32_0 : i32, i32
  }
  func.func @transform_2(%arg0: i32) -> (i32, i32) {
    %c0_i32 = arith.constant 0 : i32
    %c0_i32_0 = arith.constant 0 : i32
    %c0_i32_1 = arith.constant 0 : i32
    return %c0_i32, %c0_i32_0 : i32, i32
  }
  func.func @transform_3(%arg0: i32) -> (i32, i32) {
    %c0_i32 = arith.constant 0 : i32
    %c0_i32_0 = arith.constant 0 : i32
    %c0_i32_1 = arith.constant 0 : i32
    return %c0_i32, %c0_i32_0 : i32, i32
  }
  func.func @transform_4(%arg0: i32) -> (i32, i32) {
    %c0_i32 = arith.constant 0 : i32
    %c0_i32_0 = arith.constant 0 : i32
    %c0_i32_1 = arith.constant 0 : i32
    return %c0_i32, %c0_i32_0 : i32, i32
  }
  func.func @transform_5(%arg0: i32) -> (i32, i32) {
    %c0_i32 = arith.constant 0 : i32
    %c0_i32_0 = arith.constant 0 : i32
    %c0_i32_1 = arith.constant 0 : i32
    return %c0_i32, %c0_i32_0 : i32, i32
  }
  func.func @transform_6(%arg0: i32) -> (i32, i32) {
    %c0_i32 = arith.constant 0 : i32
    %c0_i32_0 = arith.constant 0 : i32
    %c0_i32_1 = arith.constant 0 : i32
    return %c0_i32, %c0_i32_0 : i32, i32
  }
  func.func @transform_7(%arg0: i32) -> (i32, i32) {
    %c0_i32 = arith.constant 0 : i32
    %c0_i32_0 = arith.constant 0 : i32
    return %c0_i32, %arg0 : i32, i32
  }
}

</mosaic_0001>

<llo_original>
// kernel: tpu_custom_call.1
$region0: #{tpu_custom_call.1}
  #allocation0 [shape = 'u32[]', space=smem, size = 0x4, offset = 0x4, fixed_abs, tag = 'smem constant byte address 0x4 - core index']
  #allocation1 [shape = 'u32[144,128]{1,0:T(1,128)}', space=vmem, size = 0x12000, scoped, tag = 'internal scratch']
  %s0 = inlined_call_operand.vmem [shape: bf16[48,128], index: 0, kind: input, shape index: {}]
  %s1 = inlined_call_operand.vmem [shape: bf16[64,48], index: 1, kind: input, shape index: {}]
  %s2 = inlined_call_operand.vmem [shape: f32[64,1], index: 2, kind: input, shape index: {}]
  %s3 = inlined_call_operand.vmem [shape: bf16[64,64], index: 3, kind: input, shape index: {}]
  %s4 = inlined_call_operand.vmem [shape: f32[64,1], index: 4, kind: input, shape index: {}]
  %s5 = inlined_call_operand.vmem [shape: bf16[8,64], index: 5, kind: input, shape index: {}]
  %s6 = inlined_call_operand.vmem [shape: f32[8,1], index: 6, kind: input, shape index: {}]
  %s7 = inlined_call_operand.hbm [shape: f32[8,128], index: 7, kind: output, shape index: {}]
  %s8 = sld [smem:[#allocation0]]
  $region38: #{tpu_custom_call.1} parent=0
    _
  %s10 = ssub.s32 1, %s8
  %s11 = scalar_select 0, %s10, %s8
  $region1: #{tpu_custom_call.1} parent=0
    #allocation2 [shape = 'u8[4096]{0}', space=vmem, size = 0x1000, scoped, tag = 'output window, operand 0, single buffered']
    #allocation3 [shape = 's32[1]{0}', space=sflag, size = 0x4, scoped, tag = 'scoped memory for tpu_custom_call.1']
    %12 = vsyncpa [#allocation3], 0
    // Predicated region
    $region2: #{tpu_custom_call.1} parent=1 // pred_check
      _
    $region3: #{tpu_custom_call.1} parent=1 // pred_check_branch
      %14 = sbr.rel (0) target = $region5
    $region4: #{tpu_custom_call.1} parent=1 // pred_region
      _
    $region5: #{tpu_custom_call.1} parent=1 // pred_fallthru
      _
    // Predicated region
    $region6: #{tpu_custom_call.1} parent=1 // pred_check
      _
    $region7: #{tpu_custom_call.1} parent=1 // pred_check_branch
      %16 = sbr.rel (0) target = $region9
    $region8: #{tpu_custom_call.1} parent=1 // pred_region
      _
    $region9: #{tpu_custom_call.1} parent=1 // pred_fallthru
      _
    // Predicated region
    $region10: #{tpu_custom_call.1} parent=1 // pred_check
      _
    $region11: #{tpu_custom_call.1} parent=1 // pred_check_branch
      %18 = sbr.rel (0) target = $region13
    $region12: #{tpu_custom_call.1} parent=1 // pred_region
      _
    $region13: #{tpu_custom_call.1} parent=1 // pred_fallthru
      _
    // Predicated region
    $region14: #{tpu_custom_call.1} parent=1 // pred_check
      _
    $region15: #{tpu_custom_call.1} parent=1 // pred_check_branch
      %20 = sbr.rel (0) target = $region17
    $region16: #{tpu_custom_call.1} parent=1 // pred_region
      _
    $region17: #{tpu_custom_call.1} parent=1 // pred_fallthru
      _
    // Predicated region
    $region18: #{tpu_custom_call.1} parent=1 // pred_check
      _
    $region19: #{tpu_custom_call.1} parent=1 // pred_check_branch
      %22 = sbr.rel (0) target = $region21
    $region20: #{tpu_custom_call.1} parent=1 // pred_region
      _
    $region21: #{tpu_custom_call.1} parent=1 // pred_fallthru
      _
    // Predicated region
    $region22: #{tpu_custom_call.1} parent=1 // pred_check
      _
    $region23: #{tpu_custom_call.1} parent=1 // pred_check_branch
      %24 = sbr.rel (0) target = $region25
    $region24: #{tpu_custom_call.1} parent=1 // pred_region
      _
    $region25: #{tpu_custom_call.1} parent=1 // pred_fallthru
      _
    // Predicated region
    $region26: #{tpu_custom_call.1} parent=1 // pred_check
      _
    $region27: #{tpu_custom_call.1} parent=1 // pred_check_branch
      %26 = sbr.rel (0) target = $region29
    $region28: #{tpu_custom_call.1} parent=1 // pred_region
      _
    $region29: #{tpu_custom_call.1} parent=1 // pred_fallthru
      _
    %v28 = vld [vmem:[%s0] sm:$0xf]
    %v29 = vld [vmem:[%s0 + $0x4] sm:$0xf]
    %v30 = vld [vmem:[%s0 + $0x8] sm:$0xf]
    %v31 = vld [vmem:[%s0 + $0xc] sm:$0xf]
    %v32 = vld [vmem:[%s0 + $0x10] sm:$0xf]
    %v33 = vld [vmem:[%s0 + $0x14] sm:$0xf]
    %v34 = vld [vmem:[%s1] sm:$0xf]
    %v35 = vld [vmem:[%s1 + $0x4] sm:$0xf]
    %v36 = vld [vmem:[%s1 + $0x8] sm:$0xf]
    %v37 = vld [vmem:[%s1 + $0xc] sm:$0xf]
    %v38 = vld [vmem:[%s1 + $0x10] sm:$0xf]
    %v39 = vld [vmem:[%s1 + $0x14] sm:$0xf]
    %v40 = vld [vmem:[%s1 + $0x18] sm:$0xf]
    %v41 = vld [vmem:[%s1 + $0x1c] sm:$0xf]
    %v42 = vld [vmem:[%s2] sm:$0xff]
    %v43 = vld [vmem:[%s2 + $0x8] sm:$0xff]
    %v44 = vld [vmem:[%s2 + $0x10] sm:$0xff]
    %v45 = vld [vmem:[%s2 + $0x18] sm:$0xff]
    %v46 = vld [vmem:[%s2 + $0x20] sm:$0xff]
    %v47 = vld [vmem:[%s2 + $0x28] sm:$0xff]
    %v48 = vld [vmem:[%s2 + $0x30] sm:$0xff]
    %v49 = vld [vmem:[%s2 + $0x38] sm:$0xff]
    %51 = vset.pattern.permute.xlu0 0
    %52 = vperm.xlu0 %51, %v42
    %v53 = vpop.permute.xlu0 %52
    %56 = vset.pattern.permute.xlu0 0
    %57 = vperm.xlu0 %56, %v43
    %v58 = vpop.permute.xlu0 %57
    %61 = vset.pattern.permute.xlu0 0
    %62 = vperm.xlu0 %61, %v44
    %v63 = vpop.permute.xlu0 %62
    %66 = vset.pattern.permute.xlu0 0
    %67 = vperm.xlu0 %66, %v45
    %v68 = vpop.permute.xlu0 %67
    %71 = vset.pattern.permute.xlu0 0
    %72 = vperm.xlu0 %71, %v46
    %v73 = vpop.permute.xlu0 %72
    %76 = vset.pattern.permute.xlu0 0
    %77 = vperm.xlu0 %76, %v47
    %v78 = vpop.permute.xlu0 %77
    %81 = vset.pattern.permute.xlu0 0
    %82 = vperm.xlu0 %81, %v48
    %v83 = vpop.permute.xlu0 %82
    %86 = vset.pattern.permute.xlu0 0
    %87 = vperm.xlu0 %86, %v49
    %v88 = vpop.permute.xlu0 %87
    %v98 = vunpack.c.l.b16 %v34
    %v99 = vunpack.c.l.b16 %v35
    %v100 = vunpack.c.l.b16 %v36
    %v101 = vunpack.c.l.b16 %v37
    %v102 = vunpack.c.l.b16 %v38
    %v103 = vunpack.c.l.b16 %v39
    %v104 = vunpack.c.l.b16 %v40
    %v105 = vunpack.c.l.b16 %v41
    %v106 = vpack.c.b16 %v99, %v98
    %v107 = vpack.c.b16 %v101, %v100
    %v108 = vpack.c.b16 %v103, %v102
    %v109 = vpack.c.b16 %v105, %v104
    %v116 = vunpack.c.l.b16 %v28
    %v117 = vunpack.c.l.b16 %v29
    %v118 = vunpack.c.l.b16 %v30
    %v119 = vunpack.c.l.b16 %v31
    %v120 = vunpack.c.l.b16 %v32
    %v121 = vunpack.c.l.b16 %v33
    %v122 = vpack.c.b16 %v117, %v116
    %v123 = vpack.c.b16 %v119, %v118
    %v124 = vpack.c.b16 %v121, %v120
    %vm128 = vcmask 392192
    %v130 = vsel %vm128, %v106, 0
    %v133 = vsel %vm128, %v107, 0
    %v136 = vsel %vm128, %v108, 0
    %v139 = vsel %vm128, %v109, 0
    %141 = vmatprep.subr.bf16.mxu0 0
    %142 = vmatpush1.bf16.msra.mxu0 %v122
    %143 = vmatprep.subr.bf16.mxu0 0
    %144 = vmatpush1.bf16.msra.mxu0 %v123
    %145 = vmatprep.subr.bf16.mxu0 0
    %146 = vmatpush1.bf16.msra.mxu0 %v124
    %147 = vmatprep.subr.bf16.mxu0 0
    %148 = vmatpush1.bf16.msra.mxu0 0
    %149 = vmatprep.subr.bf16.mxu0 0
    %150 = vmatpush1.bf16.msra.mxu0 0
    %151 = vmatprep.subr.bf16.mxu0 0
    %152 = vmatpush1.bf16.msra.mxu0 0
    %153 = vmatprep.subr.bf16.mxu0 0
    %154 = vmatpush1.bf16.msra.mxu0 0
    %155 = vmatprep.subr.bf16.mxu0 0
    %156 = vmatpush1.bf16.msra.mxu0 0
    %157 = vmatprep.subr.bf16.mxu0 0
    %158 = vmatpush1.bf16.msra.mxu0 0
    %159 = vmatprep.subr.bf16.mxu0 0
    %160 = vmatpush1.bf16.msra.mxu0 0
    %161 = vmatprep.subr.bf16.mxu0 0
    %162 = vmatpush1.bf16.msra.mxu0 0
    %163 = vmatprep.subr.bf16.mxu0 0
    %164 = vmatpush1.bf16.msra.mxu0 0
    %165 = vmatprep.subr.bf16.mxu0 0
    %166 = vmatpush1.bf16.msra.mxu0 0
    %167 = vmatprep.subr.bf16.mxu0 0
    %168 = vmatpush1.bf16.msra.mxu0 0
    %169 = vmatprep.subr.bf16.mxu0 0
    %170 = vmatpush1.bf16.msra.mxu0 0
    %171 = vmatprep.subr.bf16.mxu0 0
    %172 = vmatpush1.bf16.msra.mxu0 0
    %173 = vmatprep.mubr.bf16.mxu0 0
    %174 = vmatmul.mubr.bf16.gmra.mrb[0].mxu0 %v130
    %v175 = vpop.f32.mrb[0].mxu0
    %v176 = vadd.f32 %v53, %v175
    %v177 = vpop.f32.mrb[0].mxu0
    %v178 = vpop.f32.mrb[0].mxu0
    %v179 = vadd.f32 %v58, %v178
    %v180 = vpop.f32.mrb[0].mxu0
    %181 = vmatprep.mubr.bf16.mxu0 0
    %182 = vmatmul.mubr.bf16.gmra.mrb[0].mxu0 %v133
    %v183 = vpop.f32.mrb[0].mxu0
    %v184 = vadd.f32 %v63, %v183
    %v185 = vpop.f32.mrb[0].mxu0
    %v186 = vpop.f32.mrb[0].mxu0
    %v187 = vadd.f32 %v68, %v186
    %v188 = vpop.f32.mrb[0].mxu0
    %189 = vmatprep.mubr.bf16.mxu0 0
    %190 = vmatmul.mubr.bf16.gmra.mrb[0].mxu0 %v136
    %v191 = vpop.f32.mrb[0].mxu0
    %v192 = vadd.f32 %v73, %v191
    %v193 = vpop.f32.mrb[0].mxu0
    %v194 = vpop.f32.mrb[0].mxu0
    %v195 = vadd.f32 %v78, %v194
    %v196 = vpop.f32.mrb[0].mxu0
    %197 = vmatprep.mubr.bf16.mxu0 0
    %198 = vmatmul.mubr.bf16.gmra.mrb[0].mxu0 %v139
    %v199 = vpop.f32.mrb[0].mxu0
    %v200 = vadd.f32 %v83, %v199
    %v201 = vpop.f32.mrb[0].mxu0
    %v202 = vpop.f32.mrb[0].mxu0
    %v203 = vadd.f32 %v88, %v202
    %v204 = vpop.f32.mrb[0].mxu0
    %205 = vdwg.mxu0
    %vm206 = vcmp.gt.f32.partialorder %v176, 0.0
    %vm207 = vcmp.gt.f32.partialorder %v179, 0.0
    %vm208 = vcmp.gt.f32.partialorder %v184, 0.0
    %vm209 = vcmp.gt.f32.partialorder %v187, 0.0
    %vm210 = vcmp.gt.f32.partialorder %v192, 0.0
    %vm211 = vcmp.gt.f32.partialorder %v195, 0.0
    %vm212 = vcmp.gt.f32.partialorder %v200, 0.0
    %vm213 = vcmp.gt.f32.partialorder %v203, 0.0
    %v214 = vmul.f32 %v176, 0.1
    %v215 = vmul.f32 %v179, 0.1
    %v216 = vmul.f32 %v184, 0.1
    %v217 = vmul.f32 %v187, 0.1
    %v218 = vmul.f32 %v192, 0.1
    %v219 = vmul.f32 %v195, 0.1
    %v220 = vmul.f32 %v200, 0.1
    %v221 = vmul.f32 %v203, 0.1
    %v222 = vsel %vm206, %v176, %v214
    %v223 = vsel %vm207, %v179, %v215
    %v224 = vsel %vm208, %v184, %v216
    %v225 = vsel %vm209, %v187, %v217
    %v226 = vsel %vm210, %v192, %v218
    %v227 = vsel %vm211, %v195, %v219
    %v228 = vsel %vm212, %v200, %v220
    %v229 = vsel %vm213, %v203, %v221
    %v230 = vld [vmem:[%s3] sm:$0xf]
    %v231 = vld [vmem:[%s3 + $0x4] sm:$0xf]
    %v232 = vld [vmem:[%s3 + $0x8] sm:$0xf]
    %v233 = vld [vmem:[%s3 + $0xc] sm:$0xf]
    %v234 = vld [vmem:[%s3 + $0x10] sm:$0xf]
    %v235 = vld [vmem:[%s3 + $0x14] sm:$0xf]
    %v236 = vld [vmem:[%s3 + $0x18] sm:$0xf]
    %v237 = vld [vmem:[%s3 + $0x1c] sm:$0xf]
    %v238 = vpack.c.bf16 %v223, %v222
    %v239 = vpack.c.bf16 %v225, %v224
    %v240 = vpack.c.bf16 %v227, %v226
    %v241 = vpack.c.bf16 %v229, %v228
    %v242 = vld [vmem:[%s4] sm:$0xff]
    %v243 = vld [vmem:[%s4 + $0x8] sm:$0xff]
    %v244 = vld [vmem:[%s4 + $0x10] sm:$0xff]
    %v245 = vld [vmem:[%s4 + $0x18] sm:$0xff]
    %v246 = vld [vmem:[%s4 + $0x20] sm:$0xff]
    %v247 = vld [vmem:[%s4 + $0x28] sm:$0xff]
    %v248 = vld [vmem:[%s4 + $0x30] sm:$0xff]
    %v249 = vld [vmem:[%s4 + $0x38] sm:$0xff]
    %251 = vset.pattern.permute.xlu0 0
    %252 = vperm.xlu0 %251, %v242
    %v253 = vpop.permute.xlu0 %252
    %256 = vset.pattern.permute.xlu0 0
    %257 = vperm.xlu0 %256, %v243
    %v258 = vpop.permute.xlu0 %257
    %261 = vset.pattern.permute.xlu0 0
    %262 = vperm.xlu0 %261, %v244
    %v263 = vpop.permute.xlu0 %262
    %266 = vset.pattern.permute.xlu0 0
    %267 = vperm.xlu0 %266, %v245
    %v268 = vpop.permute.xlu0 %267
    %271 = vset.pattern.permute.xlu0 0
    %272 = vperm.xlu0 %271, %v246
    %v273 = vpop.permute.xlu0 %272
    %276 = vset.pattern.permute.xlu0 0
    %277 = vperm.xlu0 %276, %v247
    %v278 = vpop.permute.xlu0 %277
    %281 = vset.pattern.permute.xlu0 0
    %282 = vperm.xlu0 %281, %v248
    %v283 = vpop.permute.xlu0 %282
    %286 = vset.pattern.permute.xlu0 0
    %287 = vperm.xlu0 %286, %v249
    %v288 = vpop.permute.xlu0 %287
    %v298 = vunpack.c.l.b16 %v230
    %v299 = vunpack.c.l.b16 %v231
    %v300 = vunpack.c.l.b16 %v232
    %v301 = vunpack.c.l.b16 %v233
    %v302 = vunpack.c.l.b16 %v234
    %v303 = vunpack.c.l.b16 %v235
    %v304 = vunpack.c.l.b16 %v236
    %v305 = vunpack.c.l.b16 %v237
    %v306 = vpack.c.b16 %v299, %v298
    %v307 = vpack.c.b16 %v301, %v300
    %v308 = vpack.c.b16 %v303, %v302
    %v309 = vpack.c.b16 %v305, %v304
    %vm310 = vcmask 523264
    %v312 = vsel %vm310, %v306, 0
    %v315 = vsel %vm310, %v307, 0
    %v318 = vsel %vm310, %v308, 0
    %v321 = vsel %vm310, %v309, 0
    %323 = vmatprep.subr.bf16.mxu0 0
    %324 = vmatpush1.bf16.msra.mxu0 %v238
    %325 = vmatprep.subr.bf16.mxu0 0
    %326 = vmatpush1.bf16.msra.mxu0 %v239
    %327 = vmatprep.subr.bf16.mxu0 0
    %328 = vmatpush1.bf16.msra.mxu0 %v240
    %329 = vmatprep.subr.bf16.mxu0 0
    %330 = vmatpush1.bf16.msra.mxu0 %v241
    %331 = vmatprep.subr.bf16.mxu0 0
    %332 = vmatpush1.bf16.msra.mxu0 0
    %333 = vmatprep.subr.bf16.mxu0 0
    %334 = vmatpush1.bf16.msra.mxu0 0
    %335 = vmatprep.subr.bf16.mxu0 0
    %336 = vmatpush1.bf16.msra.mxu0 0
    %337 = vmatprep.subr.bf16.mxu0 0
    %338 = vmatpush1.bf16.msra.mxu0 0
    %339 = vmatprep.subr.bf16.mxu0 0
    %340 = vmatpush1.bf16.msra.mxu0 0
    %341 = vmatprep.subr.bf16.mxu0 0
    %342 = vmatpush1.bf16.msra.mxu0 0
    %343 = vmatprep.subr.bf16.mxu0 0
    %344 = vmatpush1.bf16.msra.mxu0 0
    %345 = vmatprep.subr.bf16.mxu0 0
    %346 = vmatpush1.bf16.msra.mxu0 0
    %347 = vmatprep.subr.bf16.mxu0 0
    %348 = vmatpush1.bf16.msra.mxu0 0
    %349 = vmatprep.subr.bf16.mxu0 0
    %350 = vmatpush1.bf16.msra.mxu0 0
    %351 = vmatprep.subr.bf16.mxu0 0
    %352 = vmatpush1.bf16.msra.mxu0 0
    %353 = vmatprep.subr.bf16.mxu0 0
    %354 = vmatpush1.bf16.msra.mxu0 0
    %355 = vmatprep.mubr.bf16.mxu0 0
    %356 = vmatmul.mubr.bf16.gmra.mrb[0].mxu0 %v312
    %v357 = vpop.f32.mrb[0].mxu0
    %v358 = vadd.f32 %v253, %v357
    %v359 = vpop.f32.mrb[0].mxu0
    %v360 = vpop.f32.mrb[0].mxu0
    %v361 = vadd.f32 %v258, %v360
    %v362 = vpop.f32.mrb[0].mxu0
    %363 = vmatprep.mubr.bf16.mxu0 0
    %364 = vmatmul.mubr.bf16.gmra.mrb[0].mxu0 %v315
    %v365 = vpop.f32.mrb[0].mxu0
    %v366 = vadd.f32 %v263, %v365
    %v367 = vpop.f32.mrb[0].mxu0
    %v368 = vpop.f32.mrb[0].mxu0
    %v369 = vadd.f32 %v268, %v368
    %v370 = vpop.f32.mrb[0].mxu0
    %371 = vmatprep.mubr.bf16.mxu0 0
    %372 = vmatmul.mubr.bf16.gmra.mrb[0].mxu0 %v318
    %v373 = vpop.f32.mrb[0].mxu0
    %v374 = vadd.f32 %v273, %v373
    %v375 = vpop.f32.mrb[0].mxu0
    %v376 = vpop.f32.mrb[0].mxu0
    %v377 = vadd.f32 %v278, %v376
    %v378 = vpop.f32.mrb[0].mxu0
    %379 = vmatprep.mubr.bf16.mxu0 0
    %380 = vmatmul.mubr.bf16.gmra.mrb[0].mxu0 %v321
    %v381 = vpop.f32.mrb[0].mxu0
    %v382 = vadd.f32 %v283, %v381
    %v383 = vpop.f32.mrb[0].mxu0
    %v384 = vpop.f32.mrb[0].mxu0
    %v385 = vadd.f32 %v288, %v384
    %v386 = vpop.f32.mrb[0].mxu0
    %387 = vdwg.mxu0
    %vm388 = vcmp.gt.f32.partialorder %v358, 0.0
    %vm389 = vcmp.gt.f32.partialorder %v361, 0.0
    %vm390 = vcmp.gt.f32.partialorder %v366, 0.0
    %vm391 = vcmp.gt.f32.partialorder %v369, 0.0
    %vm392 = vcmp.gt.f32.partialorder %v374, 0.0
    %vm393 = vcmp.gt.f32.partialorder %v377, 0.0
    %vm394 = vcmp.gt.f32.partialorder %v382, 0.0
    %vm395 = vcmp.gt.f32.partialorder %v385, 0.0
    %v396 = vmul.f32 %v358, 0.1
    %v397 = vmul.f32 %v361, 0.1
    %v398 = vmul.f32 %v366, 0.1
    %v399 = vmul.f32 %v369, 0.1
    %v400 = vmul.f32 %v374, 0.1
    %v401 = vmul.f32 %v377, 0.1
    %v402 = vmul.f32 %v382, 0.1
    %v403 = vmul.f32 %v385, 0.1
    %v404 = vsel %vm388, %v358, %v396
    %v405 = vsel %vm389, %v361, %v397
    %v406 = vsel %vm390, %v366, %v398
    %v407 = vsel %vm391, %v369, %v399
    %v408 = vsel %vm392, %v374, %v400
    %v409 = vsel %vm393, %v377, %v401
    %v410 = vsel %vm394, %v382, %v402
    %v411 = vsel %vm395, %v385, %v403
    %v412 = vld [vmem:[%s5] sm:$0xf]
    %v413 = vpack.c.bf16 %v405, %v404
    %v414 = vpack.c.bf16 %v407, %v406
    %v415 = vpack.c.bf16 %v409, %v408
    %v416 = vpack.c.bf16 %v411, %v410
    %v417 = vld [vmem:[%s6] sm:$0xff]
    %419 = vset.pattern.permute.xlu0 0
    %420 = vperm.xlu0 %419, %v417
    %v421 = vpop.permute.xlu0 %420
    %v424 = vsel %vm310, %v412, 0
    %426 = vmatprep.subr.bf16.mxu0 0
    %427 = vmatpush1.bf16.msra.mxu0 %v413
    %428 = vmatprep.subr.bf16.mxu0 0
    %429 = vmatpush1.bf16.msra.mxu0 %v414
    %430 = vmatprep.subr.bf16.mxu0 0
    %431 = vmatpush1.bf16.msra.mxu0 %v415
    %432 = vmatprep.subr.bf16.mxu0 0
    %433 = vmatpush1.bf16.msra.mxu0 %v416
    %434 = vmatprep.subr.bf16.mxu0 0
    %435 = vmatpush1.bf16.msra.mxu0 0
    %436 = vmatprep.subr.bf16.mxu0 0
    %437 = vmatpush1.bf16.msra.mxu0 0
    %438 = vmatprep.subr.bf16.mxu0 0
    %439 = vmatpush1.bf16.msra.mxu0 0
    %440 = vmatprep.subr.bf16.mxu0 0
    %441 = vmatpush1.bf16.msra.mxu0 0
    %442 = vmatprep.subr.bf16.mxu0 0
    %443 = vmatpush1.bf16.msra.mxu0 0
    %444 = vmatprep.subr.bf16.mxu0 0
    %445 = vmatpush1.bf16.msra.mxu0 0
    %446 = vmatprep.subr.bf16.mxu0 0
    %447 = vmatpush1.bf16.msra.mxu0 0
    %448 = vmatprep.subr.bf16.mxu0 0
    %449 = vmatpush1.bf16.msra.mxu0 0
    %450 = vmatprep.subr.bf16.mxu0 0
    %451 = vmatpush1.bf16.msra.mxu0 0
    %452 = vmatprep.subr.bf16.mxu0 0
    %453 = vmatpush1.bf16.msra.mxu0 0
    %454 = vmatprep.subr.bf16.mxu0 0
    %455 = vmatpush1.bf16.msra.mxu0 0
    %456 = vmatprep.subr.bf16.mxu0 0
    %457 = vmatpush1.bf16.msra.mxu0 0
    %458 = vmatprep.mubr.bf16.mxu0 0
    %459 = vmatmul.mubr.bf16.gmra.mrb[0].mxu0 %v424
    %v460 = vpop.f32.mrb[0].mxu0
    %v461 = vadd.f32 %v421, %v460
    %v462 = vpop.f32.mrb[0].mxu0
    %v463 = vpop.f32.mrb[0].mxu0
    %v464 = vpop.f32.mrb[0].mxu0
    %465 = vdwg.mxu0
    %466 = vst [vmem:[#allocation2] sm:$0xff] %v461
    // Predicated region
    $region30: #{tpu_custom_call.1} parent=1 // pred_check
      _
    $region31: #{tpu_custom_call.1} parent=1 // pred_check_branch
      %468 = sbr.rel (0) target = $region33
    $region32: #{tpu_custom_call.1} parent=1 // pred_region
      %s470 = ssub.s32 128, 128
      %471 = vsyncadd [#allocation3], %s470
      %s473 = sshll.u32 [#allocation2], 4
      %s474 = int_to_ptr.vmem [resolvable:$true] %s473
      %476 = dma.vmem_to_hbm [thread:$0]  %s474, 128, %s7, [#allocation3]
    $region33: #{tpu_custom_call.1} parent=1 // pred_fallthru
      _
    // Predicated region
    $region34: #{tpu_custom_call.1} parent=1 // pred_check
      _
    $region35: #{tpu_custom_call.1} parent=1 // pred_check_branch
      %478 = sbr.rel (0) target = $region37
    $region36: #{tpu_custom_call.1} parent=1 // pred_region
      %479 = dma.done [#allocation3], 128
    $region37: #{tpu_custom_call.1} parent=1 // pred_fallthru
      _
    %480 = vsyncpa [#allocation3], 1

</llo_original>
